<compile_context>
chip_gen: v7x
topology: tpu7x:2x2x1
jax: 0.10.0
libtpu: 0.0.40
codegen_flags: <defaults>
</compile_context>

<pallas_src>
import jax
import jax.numpy as jnp
from jax import lax
from jax.experimental import pallas as pl
from jax.experimental.pallas import tpu as pltpu


def _round_up(x, m):
    return (x + m - 1) // m * m


# ----------------------------------------------------------------------------------
# Pallas kernel: one (batch, L-tile) block per grid step.  x is DMA'd manually from
# HBM (overlapping halo windows) with a 2-slot prefetch ring; everything else
# (weights, biases, output tile) uses the automatic BlockSpec pipeline.
# ----------------------------------------------------------------------------------
def _make_kernel(TL, W, d, L_valid, Cip, Cop, nT):
    TLh8 = _round_up(TL + 2 * d, 8)   # conv1 output rows computed (sublane-aligned)

    def kernel(x_hbm, w1_ref, b1_ref, w2_ref, b2_ref, o_ref, xbuf, sem):
        n = pl.program_id(0)
        t = pl.program_id(1)
        slot = lax.rem(t, 2)

        def issue(batch, row0, sl):
            pltpu.make_async_copy(
                x_hbm.at[batch, pl.ds(row0, W), :], xbuf.at[sl], sem.at[sl]
            ).start()

        # Prime the ring at the first L-tile of every batch element (robust no matter
        # how the "parallel" batch axis is partitioned across TensorCores).
        @pl.when(t == 0)
        def _():
            issue(n, 0, 0)

        # Wait for this tile's halo window (same-shaped placeholder src for the wait).
        pltpu.make_async_copy(
            x_hbm.at[0, pl.ds(0, W), :], xbuf.at[slot], sem.at[slot]
        ).wait()

        # Prefetch the next L-tile of the same batch element into the other slot.
        @pl.when(t + 1 < nT)
        def _():
            issue(n, (t + 1) * TL, 1 - slot)

        x = xbuf[slot]                                   # (W, Cip) bf16

        # ---- conv1 (+ folded BN1) + ReLU : three accumulating MXU matmuls ----------
        h = jnp.dot(x[0:TLh8, :], w1_ref[0:Cip, :],
                    preferred_element_type=jnp.float32)
        h = h + jnp.dot(x[d:d + TLh8, :], w1_ref[Cip:2 * Cip, :],
                        preferred_element_type=jnp.float32)
        h = h + jnp.dot(x[2 * d:2 * d + TLh8, :], w1_ref[2 * Cip:3 * Cip, :],
                        preferred_element_type=jnp.float32)
        h = jnp.maximum(h + b1_ref[...], 0.0)

        # dropout: eval-mode identity

        # conv2 must see zero padding outside the valid sequence [0, L), not
        # relu(bias) computed on the halo rows.
        r = lax.broadcasted_iota(jnp.int32, (TLh8, 1), 0)
        pos = t * TL - d + r
        h = jnp.where((pos >= 0) & (pos < L_valid), h, 0.0)
        hb = h.astype(jnp.bfloat16)

        # ---- conv2 (+ folded BN2) over the central TL rows + final ReLU ------------
        y = jnp.dot(hb[0:TL, :], w2_ref[0:Cop, :],
                    preferred_element_type=jnp.float32)
        y = y + jnp.dot(hb[d:d + TL, :], w2_ref[Cop:2 * Cop, :],
                        preferred_element_type=jnp.float32)
        y = y + jnp.dot(hb[2 * d:2 * d + TL, :], w2_ref[2 * Cop:3 * Cop, :],
                        preferred_element_type=jnp.float32)
        y = jnp.maximum(y + b2_ref[...], 0.0)

        o_ref[0] = y.astype(o_ref.dtype)

    return kernel


# ----------------------------------------------------------------------------------
# Wrapper: BN folding, channel/length padding, VMEM-aware tile selection, pallas_call
# ----------------------------------------------------------------------------------
def temporal_conv_block(x_ncl, p, dilation=1, max_tile_rows=1024):
    """x_ncl: (N, C_in, L) float32 — same convention as the PyTorch module."""
    eps = 1e-5
    N, Cin, L = x_ncl.shape
    Cout = p["conv1_w"].shape[0]
    d = int(dilation)

    # lane-dense channel padding (see small-channel TODO at the top)
    Cip = _round_up(Cin, 128)
    Cop = _round_up(Cout, 128)

    # ---- generation-aware VMEM budget (v5e/v6e: 128 MiB, v7x: 64 MiB) ---------------
    try:
        vmem_cap = int(pltpu.get_tpu_info().vmem_capacity_bytes)
    except Exception:
        vmem_cap = 64 * 1024 * 1024                      # conservative (v7x-sized) fallback
    vmem_budget = max(32 * 1024 * 1024, min(int(vmem_cap * 0.75), 100 * 1024 * 1024))

    def vmem_estimate(tl):
        tlh8 = _round_up(tl + 2 * d, 8)
        w = _round_up(tlh8 + 2 * d, 8)
        x_ring = 2 * w * Cip * 2                              # bf16 halo ring (2 slots)
        wgts = 2 * (3 * Cip * Cop + 3 * Cop * Cop) * 2        # double-buffered weights
        out_bufs = 2 * tl * Cop * 2                           # double-buffered bf16 out tile
        live = w * Cip * 2 + tlh8 * Cop * (4 + 2) + tl * Cop * 4
        return x_ring + wgts + out_bufs + live

    # L-tile selection: multiple of 8, as large as the VMEM budget allows
    L8 = _round_up(L, 8)
    tile_cap = max(8, _round_up(min(max_tile_rows, L8), 8))
    while tile_cap > 8 and vmem_estimate(tile_cap) > vmem_budget - 8 * 1024 * 1024:
        tile_cap = max(8, _round_up(tile_cap // 2, 8))
    nT = -(-L8 // tile_cap)
    TL = _round_up(-(-L8 // nT), 8)
    L_pad = nT * TL

    TLh8 = _round_up(TL + 2 * d, 8)
    W = _round_up(TLh8 + 2 * d, 8)           # halo window rows DMA'd per tile

    # fold BN (eval mode) into conv weights / bias:
    #   bn(conv(x) + b) = conv(x) * s + (b - mean) * s + beta,  s = gamma / sqrt(var+eps)
    s1 = p["bn1_gamma"] / jnp.sqrt(p["bn1_var"] + eps)
    b1 = (p["conv1_b"] - p["bn1_mean"]) * s1 + p["bn1_beta"]
    s2 = p["bn2_gamma"] / jnp.sqrt(p["bn2_var"] + eps)
    b2 = (p["conv2_b"] - p["bn2_mean"]) * s2 + p["bn2_beta"]

    def prep_w(w, s, ci, ci_p, co, co_p):
        w = w * s[:, None, None]                       # fold BN scale before bf16 cast
        w = jnp.transpose(w, (2, 1, 0))                # (3, Cin, Cout)
        w = jnp.pad(w, ((0, 0), (0, ci_p - ci), (0, co_p - co)))
        return w.reshape(3 * ci_p, co_p).astype(jnp.bfloat16)   # tap-stacked rows

    w1 = prep_w(p["conv1_w"], s1, Cin, Cip, Cout, Cop)
    w2 = prep_w(p["conv2_w"], s2, Cout, Cop, Cout, Cop)
    b1p = jnp.pad(b1, (0, Cop - Cout)).reshape(1, Cop).astype(jnp.float32)
    b2p = jnp.pad(b2, (0, Cop - Cout)).reshape(1, Cop).astype(jnp.float32)

    # NCL -> NLC (bf16), pad channels, 2d front halo + back padding so every tile's
    # [t*TL, t*TL + W) window is in-bounds (zeros outside the valid sequence).
    Lp = (nT - 1) * TL + W
    x_nlc = jnp.transpose(x_ncl, (0, 2, 1)).astype(jnp.bfloat16)
    x_nlc = jnp.pad(x_nlc, ((0, 0), (2 * d, Lp - L - 2 * d), (0, Cip - Cin)))

    kernel = _make_kernel(TL, W, d, L, Cip, Cop, nT)

    out = pl.pallas_call(
        kernel,
        out_shape=jax.ShapeDtypeStruct((N, L_pad, Cop), jnp.bfloat16),
        grid_spec=pltpu.PrefetchScalarGridSpec(
            num_scalar_prefetch=0,
            grid=(N, nT),
            in_specs=[
                pl.BlockSpec(memory_space=pl.ANY),                    # x stays in HBM
                pl.BlockSpec((3 * Cip, Cop), lambda n, t: (0, 0)),    # w1 (tap-stacked)
                pl.BlockSpec((1, Cop), lambda n, t: (0, 0)),          # b1
                pl.BlockSpec((3 * Cop, Cop), lambda n, t: (0, 0)),    # w2
                pl.BlockSpec((1, Cop), lambda n, t: (0, 0)),          # b2
            ],
            out_specs=pl.BlockSpec((1, TL, Cop), lambda n, t: (n, t, 0)),
            scratch_shapes=[
                pltpu.VMEM((2, W, Cip), jnp.bfloat16),    # x halo-window prefetch ring
                pltpu.SemaphoreType.DMA((2,)),
            ],
        ),
        compiler_params=pltpu.CompilerParams(
            # batch axis may be megacore-sharded; the L-tile axis carries the DMA ring
            # state (prefetch of tile t+1), so it must stay sequential.
            dimension_semantics=("parallel", "arbitrary"),
            vmem_limit_bytes=int(vmem_budget),
        ),
    )(x_nlc, w1, b1p, w2, b2p)

    # strip channel / length padding, back to NCL, f32
    return jnp.transpose(out[:, :L, :Cout], (0, 2, 1)).astype(jnp.float32)


# ----------------------------------------------------------------------------------
# Deterministic parameter init (shapes follow the PyTorch __init__)
# ----------------------------------------------------------------------------------
def init_params(key, in_ch, out_ch):
    ks = jax.random.split(key, 12)
    return {
        "conv1_w": 0.2 * jax.random.normal(ks[0], (out_ch, in_ch, 3), jnp.float32),
        "conv1_b": 0.1 * jax.random.normal(ks[1], (out_ch,), jnp.float32),
        "bn1_gamma": 1.0 + 0.1 * jax.random.normal(ks[2], (out_ch,), jnp.float32),
        "bn1_beta": 0.1 * jax.random.normal(ks[3], (out_ch,), jnp.float32),
        "bn1_mean": 0.1 * jax.random.normal(ks[4], (out_ch,), jnp.float32),
        "bn1_var": jax.random.uniform(ks[5], (out_ch,), jnp.float32, 0.5, 1.5),
        "conv2_w": 0.2 * jax.random.normal(ks[6], (out_ch, out_ch, 3), jnp.float32),
        "conv2_b": 0.1 * jax.random.normal(ks[7], (out_ch,), jnp.float32),
        "bn2_gamma": 1.0 + 0.1 * jax.random.normal(ks[8], (out_ch,), jnp.float32),
        "bn2_beta": 0.1 * jax.random.normal(ks[9], (out_ch,), jnp.float32),
        "bn2_mean": 0.1 * jax.random.normal(ks[10], (out_ch,), jnp.float32),
        "bn2_var": jax.random.uniform(ks[11], (out_ch,), jnp.float32, 0.5, 1.5),
    }


# ----------------------------------------------------------------------------------
# Pure-JAX reference (mirrors PyTorch eval-mode forward) for a correctness check
# ----------------------------------------------------------------------------------
def reference_forward(x, p, dilation=1):
    eps = 1e-5

    def conv1d(x, w, b, dil, pad):
        y = lax.conv_general_dilated(
            x, w, window_strides=(1,), padding=[(pad, pad)], rhs_dilation=(dil,),
            dimension_numbers=("NCH", "OIH", "NCH"))
        return y + b[None, :, None]

    def bn(y, g, b, m, v):
        return (y - m[None, :, None]) * (g / jnp.sqrt(v + eps))[None, :, None] \
               + b[None, :, None]

    out = jax.nn.relu(bn(conv1d(x, p["conv1_w"], p["conv1_b"], dilation, dilation),
                         p["bn1_gamma"], p["bn1_beta"], p["bn1_mean"], p["bn1_var"]))
    # dropout: eval-mode identity
    out = jax.nn.relu(bn(conv1d(out, p["conv2_w"], p["conv2_b"], dilation, dilation),
                         p["bn2_gamma"], p["bn2_beta"], p["bn2_mean"], p["bn2_var"]))
    return out


if __name__ == "__main__":
    key = jax.random.PRNGKey(0)

    # --- small demo shape (matches the module's Conv1d NCL convention) -------------
    N, Cin, Cout, L, dilation = 2, 4, 8, 16, 1
    k_x, k_p, k_x2, k_p2 = jax.random.split(key, 4)
    x = jax.random.normal(k_x, (N, Cin, L), jnp.float32)
    params = init_params(k_p, Cin, Cout)

    out = jax.block_until_ready(temporal_conv_block(x, params, dilation=dilation))
    ref = reference_forward(x, params, dilation=dilation)
    assert out.shape == (N, Cout, L)
    assert bool(jnp.allclose(out, ref, atol=3e-2, rtol=3e-2)), "mismatch vs reference (1)"

    # --- second shape exercising the multi-tile prefetch ring, halo mask, dilation=2
    N2, Cin2, Cout2, L2, dil2 = 2, 3, 5, 144, 2
    x2 = jax.random.normal(k_x2, (N2, Cin2, L2), jnp.float32)
    params2 = init_params(k_p2, Cin2, Cout2)

    out2 = jax.block_until_ready(
        temporal_conv_block(x2, params2, dilation=dil2, max_tile_rows=64))
    ref2 = reference_forward(x2, params2, dilation=dil2)
    assert out2.shape == (N2, Cout2, L2)
    assert bool(jnp.allclose(out2, ref2, atol=3e-2, rtol=3e-2)), "mismatch vs reference (2)"

    print("KERNEL_OK")
</pallas_src>

<mosaic_0001>
module attributes {stable_mosaic.version = 11 : i64} {
  func.func @kernel(%arg0: i32, %arg1: i32, %arg2: memref<2x32x128xbf16, #tpu.memory_space<any>>, %arg3: memref<384x128xbf16, #tpu.memory_space<vmem>>, %arg4: memref<1x128xf32, #tpu.memory_space<vmem>>, %arg5: memref<384x128xbf16, #tpu.memory_space<vmem>>, %arg6: memref<1x128xf32, #tpu.memory_space<vmem>>, %arg7: memref<1x16x128xbf16, #tpu.memory_space<vmem>>, %arg8: memref<2x32x128xbf16, #tpu.memory_space<vmem>>, %arg9: memref<2x!tpu.dma_semaphore, #tpu.memory_space<semaphore_mem>>) attributes {dimension_semantics = [#tpu.dimension_semantics<parallel>, #tpu.dimension_semantics<arbitrary>], iteration_bounds = array<i64: 2, 1>, scalar_prefetch = 0 : i64, scratch_operands = 2 : i64, tpu.core_type = #tpu.core_type<tc>, window_params = [{}, {pipeline_mode = #tpu.pipeline_mode<synchronous>, transform_indices = @transform_1, window_bounds = array<i64: 384, 128>}, {pipeline_mode = #tpu.pipeline_mode<synchronous>, transform_indices = @transform_2, window_bounds = array<i64: 1, 128>}, {pipeline_mode = #tpu.pipeline_mode<synchronous>, transform_indices = @transform_3, window_bounds = array<i64: 384, 128>}, {pipeline_mode = #tpu.pipeline_mode<synchronous>, transform_indices = @transform_4, window_bounds = array<i64: 1, 128>}, {transform_indices = @transform_5, window_bounds = array<i64: 1, 16, 128>}]} {
    %c2_i32 = arith.constant 2 : i32
    %0 = arith.remsi %arg1, %c2_i32 : i32
    %c0_i32 = arith.constant 0 : i32
    %1 = arith.cmpi eq, %arg1, %c0_i32 : i32
    %2 = arith.extui %1 : i1 to i32
    %c0_i32_0 = arith.constant 0 : i32
    %3 = arith.cmpi ne, %2, %c0_i32_0 : i32
    scf.if %3 {
      %c0_i32_37 = arith.constant 0 : i32
      %c0_i32_38 = arith.constant 0 : i32
      %c0_i32_39 = arith.constant 0 : i32
      %c0_i32_40 = arith.constant 0 : i32
      %68 = tpu.memref_slice %arg2[%arg0, %c0_i32_39, %c0_i32_40] : memref<2x32x128xbf16, #tpu.memory_space<any>> -> memref<1x32x128xbf16, #tpu.memory_space<any>>
      %69 = tpu.memref_squeeze %68 : memref<1x32x128xbf16, #tpu.memory_space<any>> -> memref<32x128xbf16, #tpu.memory_space<any>>
      %c0_i32_41 = arith.constant 0 : i32
      %c0_i32_42 = arith.constant 0 : i32
      %70 = tpu.memref_slice %arg8[%c0_i32_37, %c0_i32_41, %c0_i32_42] : memref<2x32x128xbf16, #tpu.memory_space<vmem>> -> memref<1x32x128xbf16, #tpu.memory_space<vmem>>
      %71 = tpu.memref_squeeze %70 : memref<1x32x128xbf16, #tpu.memory_space<vmem>> -> memref<32x128xbf16, #tpu.memory_space<vmem>>
      %72 = tpu.memref_slice %arg9[%c0_i32_38] : memref<2x!tpu.dma_semaphore, #tpu.memory_space<semaphore_mem>> -> memref<1x!tpu.dma_semaphore, #tpu.memory_space<semaphore_mem>>
      %73 = tpu.memref_squeeze %72 : memref<1x!tpu.dma_semaphore, #tpu.memory_space<semaphore_mem>> -> memref<!tpu.dma_semaphore, #tpu.memory_space<semaphore_mem>>
      tpu.enqueue_dma source(%69 : memref<32x128xbf16, #tpu.memory_space<any>>) target(%71 : memref<32x128xbf16, #tpu.memory_space<vmem>>) target_semaphore(%73 : memref<!tpu.dma_semaphore, #tpu.memory_space<semaphore_mem>>)
    } else {
    }
    %c0_i32_1 = arith.constant 0 : i32
    %c0_i32_2 = arith.constant 0 : i32
    %c0_i32_3 = arith.constant 0 : i32
    %4 = tpu.memref_slice %arg2[%c0_i32_1, %c0_i32_2, %c0_i32_3] : memref<2x32x128xbf16, #tpu.memory_space<any>> -> memref<1x32x128xbf16, #tpu.memory_space<any>>
    %5 = tpu.memref_squeeze %4 : memref<1x32x128xbf16, #tpu.memory_space<any>> -> memref<32x128xbf16, #tpu.memory_space<any>>
    %c0_i32_4 = arith.constant 0 : i32
    %c0_i32_5 = arith.constant 0 : i32
    %6 = tpu.memref_slice %arg8[%0, %c0_i32_4, %c0_i32_5] : memref<2x32x128xbf16, #tpu.memory_space<vmem>> -> memref<1x32x128xbf16, #tpu.memory_space<vmem>>
    %7 = tpu.memref_squeeze %6 : memref<1x32x128xbf16, #tpu.memory_space<vmem>> -> memref<32x128xbf16, #tpu.memory_space<vmem>>
    %8 = tpu.memref_slice %arg9[%0] : memref<2x!tpu.dma_semaphore, #tpu.memory_space<semaphore_mem>> -> memref<1x!tpu.dma_semaphore, #tpu.memory_space<semaphore_mem>>
    %9 = tpu.memref_squeeze %8 : memref<1x!tpu.dma_semaphore, #tpu.memory_space<semaphore_mem>> -> memref<!tpu.dma_semaphore, #tpu.memory_space<semaphore_mem>>
    tpu.wait_dma2 semaphore(%9 : memref<!tpu.dma_semaphore, #tpu.memory_space<semaphore_mem>>) src(%5 : memref<32x128xbf16, #tpu.memory_space<any>>) dst(%7 : memref<32x128xbf16, #tpu.memory_space<vmem>>)
    %c1_i32 = arith.constant 1 : i32
    %10 = arith.addi %arg1, %c1_i32 : i32
    %c1_i32_6 = arith.constant 1 : i32
    %11 = arith.cmpi slt, %10, %c1_i32_6 : i32
    %12 = arith.extui %11 : i1 to i32
    %c0_i32_7 = arith.constant 0 : i32
    %13 = arith.cmpi ne, %12, %c0_i32_7 : i32
    scf.if %13 {
      %c1_i32_37 = arith.constant 1 : i32
      %68 = arith.addi %arg1, %c1_i32_37 : i32
      %c16_i32_38 = arith.constant 16 : i32
      %69 = arith.muli %68, %c16_i32_38 : i32
      %c1_i32_39 = arith.constant 1 : i32
      %70 = arith.subi %c1_i32_39, %0 : i32
      %c0_i32_40 = arith.constant 0 : i32
      %71 = tpu.memref_slice %arg2[%arg0, %69, %c0_i32_40] : memref<2x32x128xbf16, #tpu.memory_space<any>> -> memref<1x32x128xbf16, #tpu.memory_space<any>>
      %72 = tpu.memref_squeeze %71 : memref<1x32x128xbf16, #tpu.memory_space<any>> -> memref<32x128xbf16, #tpu.memory_space<any>>
      %c0_i32_41 = arith.constant 0 : i32
      %c0_i32_42 = arith.constant 0 : i32
      %73 = tpu.memref_slice %arg8[%70, %c0_i32_41, %c0_i32_42] : memref<2x32x128xbf16, #tpu.memory_space<vmem>> -> memref<1x32x128xbf16, #tpu.memory_space<vmem>>
      %74 = tpu.memref_squeeze %73 : memref<1x32x128xbf16, #tpu.memory_space<vmem>> -> memref<32x128xbf16, #tpu.memory_space<vmem>>
      %75 = tpu.memref_slice %arg9[%70] : memref<2x!tpu.dma_semaphore, #tpu.memory_space<semaphore_mem>> -> memref<1x!tpu.dma_semaphore, #tpu.memory_space<semaphore_mem>>
      %76 = tpu.memref_squeeze %75 : memref<1x!tpu.dma_semaphore, #tpu.memory_space<semaphore_mem>> -> memref<!tpu.dma_semaphore, #tpu.memory_space<semaphore_mem>>
      tpu.enqueue_dma source(%72 : memref<32x128xbf16, #tpu.memory_space<any>>) target(%74 : memref<32x128xbf16, #tpu.memory_space<vmem>>) target_semaphore(%76 : memref<!tpu.dma_semaphore, #tpu.memory_space<semaphore_mem>>)
    } else {
    }
    %14 = arith.index_cast %0 : i32 to index
    %c0 = arith.constant 0 : index
    %c0_8 = arith.constant 0 : index
    %15 = vector.load %arg8[%14, %c0, %c0_8] : memref<2x32x128xbf16, #tpu.memory_space<vmem>>, vector<1x32x128xbf16>
    %16 = vector.shape_cast %15 : vector<1x32x128xbf16> to vector<32x128xbf16>
    %17 = vector.extract_strided_slice %16 {offsets = [0, 0], sizes = [24, 128], strides = [1, 1]} : vector<32x128xbf16> to vector<24x128xbf16>
    %c0_9 = arith.constant 0 : index
    %c0_10 = arith.constant 0 : index
    %18 = vector.load %arg3[%c0_9, %c0_10] : memref<384x128xbf16, #tpu.memory_space<vmem>>, vector<128x128xbf16>
    %cst = arith.constant dense<0.000000e+00> : vector<24x128xf32>
    %19 = tpu.matmul %17, %18, %cst {dimension_numbers = #tpu.dot_dimension_numbers<[1], [0], [0], [1], [0, 0, 1, 1], [], []>} : vector<24x128xbf16>, vector<128x128xbf16>, vector<24x128xf32> -> vector<24x128xf32>
    %20 = vector.extract_strided_slice %16 {offsets = [1, 0], sizes = [24, 128], strides = [1, 1]} : vector<32x128xbf16> to vector<24x128xbf16>
    %c128 = arith.constant 128 : index
    %c0_11 = arith.constant 0 : index
    %21 = vector.load %arg3[%c128, %c0_11] : memref<384x128xbf16, #tpu.memory_space<vmem>>, vector<128x128xbf16>
    %cst_12 = arith.constant dense<0.000000e+00> : vector<24x128xf32>
    %22 = tpu.matmul %20, %21, %cst_12 {dimension_numbers = #tpu.dot_dimension_numbers<[1], [0], [0], [1], [0, 0, 1, 1], [], []>} : vector<24x128xbf16>, vector<128x128xbf16>, vector<24x128xf32> -> vector<24x128xf32>
    %23 = arith.addf %19, %22 : vector<24x128xf32>
    %24 = vector.extract_strided_slice %16 {offsets = [2, 0], sizes = [24, 128], strides = [1, 1]} : vector<32x128xbf16> to vector<24x128xbf16>
    %c256 = arith.constant 256 : index
    %c0_13 = arith.constant 0 : index
    %25 = vector.load %arg3[%c256, %c0_13] : memref<384x128xbf16, #tpu.memory_space<vmem>>, vector<128x128xbf16>
    %cst_14 = arith.constant dense<0.000000e+00> : vector<24x128xf32>
    %26 = tpu.matmul %24, %25, %cst_14 {dimension_numbers = #tpu.dot_dimension_numbers<[1], [0], [0], [1], [0, 0, 1, 1], [], []>} : vector<24x128xbf16>, vector<128x128xbf16>, vector<24x128xf32> -> vector<24x128xf32>
    %27 = arith.addf %23, %26 : vector<24x128xf32>
    %c0_15 = arith.constant 0 : index
    %c0_16 = arith.constant 0 : index
    %28 = vector.load %arg4[%c0_15, %c0_16] : memref<1x128xf32, #tpu.memory_space<vmem>>, vector<1x128xf32>
    %29 = vector.broadcast %28 : vector<1x128xf32> to vector<24x128xf32>
    %30 = arith.addf %27, %29 : vector<24x128xf32>
    %cst_17 = arith.constant 0.000000e+00 : f32
    %31 = vector.broadcast %cst_17 : f32 to vector<24x128xf32>
    %32 = arith.maximumf %30, %31 : vector<24x128xf32>
    %33 = tpu.iota {dimensions = array<i32: 0>} : vector<24x1xi32>
    %c16_i32 = arith.constant 16 : i32
    %34 = arith.muli %arg1, %c16_i32 : i32
    %c1_i32_18 = arith.constant 1 : i32
    %35 = arith.subi %34, %c1_i32_18 : i32
    %36 = vector.broadcast %35 : i32 to vector<24x1xi32>
    %37 = arith.addi %36, %33 : vector<24x1xi32>
    %c0_i32_19 = arith.constant 0 : i32
    %38 = vector.broadcast %c0_i32_19 : i32 to vector<24x1xi32>
    %39 = arith.cmpi sge, %37, %38 : vector<24x1xi32>
    %c16_i32_20 = arith.constant 16 : i32
    %40 = vector.broadcast %c16_i32_20 : i32 to vector<24x1xi32>
    %41 = arith.cmpi slt, %37, %40 : vector<24x1xi32>
    %42 = arith.andi %39, %41 : vector<24x1xi1>
    %cst_21 = arith.constant 0.000000e+00 : f32
    %43 = vector.shape_cast %42 : vector<24x1xi1> to vector<24x1xi1>
    %44 = vector.broadcast %43 : vector<24x1xi1> to vector<24x128xi1>
    %45 = vector.broadcast %cst_21 : f32 to vector<24x128xf32>
    %46 = arith.select %44, %32, %45 : vector<24x128xi1>, vector<24x128xf32>
    %47 = arith.truncf %46 : vector<24x128xf32> to vector<24x128xbf16>
    %48 = vector.extract_strided_slice %47 {offsets = [0, 0], sizes = [16, 128], strides = [1, 1]} : vector<24x128xbf16> to vector<16x128xbf16>
    %c0_22 = arith.constant 0 : index
    %c0_23 = arith.constant 0 : index
    %49 = vector.load %arg5[%c0_22, %c0_23] : memref<384x128xbf16, #tpu.memory_space<vmem>>, vector<128x128xbf16>
    %cst_24 = arith.constant dense<0.000000e+00> : vector<16x128xf32>
    %50 = tpu.matmul %48, %49, %cst_24 {dimension_numbers = #tpu.dot_dimension_numbers<[1], [0], [0], [1], [0, 0, 1, 1], [], []>} : vector<16x128xbf16>, vector<128x128xbf16>, vector<16x128xf32> -> vector<16x128xf32>
    %51 = vector.extract_strided_slice %47 {offsets = [1, 0], sizes = [16, 128], strides = [1, 1]} : vector<24x128xbf16> to vector<16x128xbf16>
    %c128_25 = arith.constant 128 : index
    %c0_26 = arith.constant 0 : index
    %52 = vector.load %arg5[%c128_25, %c0_26] : memref<384x128xbf16, #tpu.memory_space<vmem>>, vector<128x128xbf16>
    %cst_27 = arith.constant dense<0.000000e+00> : vector<16x128xf32>
    %53 = tpu.matmul %51, %52, %cst_27 {dimension_numbers = #tpu.dot_dimension_numbers<[1], [0], [0], [1], [0, 0, 1, 1], [], []>} : vector<16x128xbf16>, vector<128x128xbf16>, vector<16x128xf32> -> vector<16x128xf32>
    %54 = arith.addf %50, %53 : vector<16x128xf32>
    %55 = vector.extract_strided_slice %47 {offsets = [2, 0], sizes = [16, 128], strides = [1, 1]} : vector<24x128xbf16> to vector<16x128xbf16>
    %c256_28 = arith.constant 256 : index
    %c0_29 = arith.constant 0 : index
    %56 = vector.load %arg5[%c256_28, %c0_29] : memref<384x128xbf16, #tpu.memory_space<vmem>>, vector<128x128xbf16>
    %cst_30 = arith.constant dense<0.000000e+00> : vector<16x128xf32>
    %57 = tpu.matmul %55, %56, %cst_30 {dimension_numbers = #tpu.dot_dimension_numbers<[1], [0], [0], [1], [0, 0, 1, 1], [], []>} : vector<16x128xbf16>, vector<128x128xbf16>, vector<16x128xf32> -> vector<16x128xf32>
    %58 = arith.addf %54, %57 : vector<16x128xf32>
    %c0_31 = arith.constant 0 : index
    %c0_32 = arith.constant 0 : index
    %59 = vector.load %arg6[%c0_31, %c0_32] : memref<1x128xf32, #tpu.memory_space<vmem>>, vector<1x128xf32>
    %60 = vector.broadcast %59 : vector<1x128xf32> to vector<16x128xf32>
    %61 = arith.addf %58, %60 : vector<16x128xf32>
    %cst_33 = arith.constant 0.000000e+00 : f32
    %62 = vector.broadcast %cst_33 : f32 to vector<16x128xf32>
    %63 = arith.maximumf %61, %62 : vector<16x128xf32>
    %64 = arith.truncf %63 : vector<16x128xf32> to vector<16x128xbf16>
    %c0_34 = arith.constant 0 : index
    %c0_35 = arith.constant 0 : index
    %c0_36 = arith.constant 0 : index
    %65 = vector.load %arg7[%c0_34, %c0_35, %c0_36] : memref<1x16x128xbf16, #tpu.memory_space<vmem>>, vector<1x16x128xbf16>
    %66 = vector.shape_cast %65 : vector<1x16x128xbf16> to vector<16x128xbf16>
    %67 = vector.shape_cast %64 : vector<16x128xbf16> to vector<1x16x128xbf16>
    tpu.vector_store %arg7[%c0_34, %c0_35, %c0_36], %67 {strides = array<i32>} : memref<1x16x128xbf16, #tpu.memory_space<vmem>>, vector<1x16x128xbf16>,
    return
  }
  func.func @transform_1(%arg0: i32, %arg1: i32) -> (i32, i32) {
    %c0_i32 = arith.constant 0 : i32
    %c0_i32_0 = arith.constant 0 : i32
    %c0_i32_1 = arith.constant 0 : i32
    return %c0_i32, %c0_i32_0 : i32, i32
  }
  func.func @transform_2(%arg0: i32, %arg1: i32) -> (i32, i32) {
    %c0_i32 = arith.constant 0 : i32
    %c0_i32_0 = arith.constant 0 : i32
    %c0_i32_1 = arith.constant 0 : i32
    return %c0_i32, %c0_i32_0 : i32, i32
  }
  func.func @transform_3(%arg0: i32, %arg1: i32) -> (i32, i32) {
    %c0_i32 = arith.constant 0 : i32
    %c0_i32_0 = arith.constant 0 : i32
    %c0_i32_1 = arith.constant 0 : i32
    return %c0_i32, %c0_i32_0 : i32, i32
  }
  func.func @transform_4(%arg0: i32, %arg1: i32) -> (i32, i32) {
    %c0_i32 = arith.constant 0 : i32
    %c0_i32_0 = arith.constant 0 : i32
    %c0_i32_1 = arith.constant 0 : i32
    return %c0_i32, %c0_i32_0 : i32, i32
  }
  func.func @transform_5(%arg0: i32, %arg1: i32) -> (i32, i32, i32) {
    %c0_i32 = arith.constant 0 : i32
    %c0_i32_0 = arith.constant 0 : i32
    return %arg0, %arg1, %c0_i32 : i32, i32, i32
  }
}

</mosaic_0001>

<llo_original>
// kernel: tpu_custom_call.1
$region0: #{tpu_custom_call.1}
  #allocation0 [shape = 'u32[]', space=smem, size = 0x4, offset = 0x4, fixed_abs, tag = 'smem constant byte address 0x4 - core index']
  #allocation1 [shape = 'u32[144,128]{1,0:T(1,128)}', space=vmem, size = 0x12000, scoped, tag = 'internal scratch']
  #allocation2 [shape = 'bf16[2,32,128]{2,1,0:T(16,128)(2,1)}', space=vmem, size = 0x4000, scoped, tag = 'scratch operand']
  #allocation3 [shape = 's32[2]{0}', space=sflag, size = 0x8, scoped, tag = 'scratch operand']
  #allocation10 [shape = 's32[]', space=sflag, size = 0x4, offset = 0, fixed_abs, tag = 'sflag constant byte address 0x0 - dummy sync flag']
  #allocation11 [shape = 's32[]', space=sflag, size = 0x4, offset = 0, fixed_abs, tag = 'sflag constant byte address 0x0 - dummy sync flag']
  #allocation12 [shape = 'u32[]', space=smem, size = 0x4, offset = 0x44, fixed_abs, tag = 'smem constant byte address 0x44 - assertion arg 0']
  #allocation13 [shape = 'u32[]', space=smem, size = 0x4, offset = 0x48, fixed_abs, tag = 'smem constant byte address 0x48 - assertion arg 1']
  #allocation14 [shape = 's32[]', space=sflag, size = 0x4, offset = 0, fixed_abs, tag = 'sflag constant byte address 0x0 - dummy sync flag']
  #allocation15 [shape = 's32[]', space=sflag, size = 0x4, offset = 0, fixed_abs, tag = 'sflag constant byte address 0x0 - dummy sync flag']
  %s0 = inlined_call_operand.hbm [shape: bf16[2,32,128], index: 0, kind: input, shape index: {}]
  %s1 = inlined_call_operand.hbm [shape: bf16[384,128], index: 1, kind: input, shape index: {}]
  %s2 = inlined_call_operand.vmem [shape: f32[1,128], index: 2, kind: input, shape index: {}]
  %s3 = inlined_call_operand.hbm [shape: bf16[384,128], index: 3, kind: input, shape index: {}]
  %s4 = inlined_call_operand.vmem [shape: f32[1,128], index: 4, kind: input, shape index: {}]
  %s5 = inlined_call_operand.hbm [shape: bf16[2,16,128], index: 5, kind: output, shape index: {}]
  %s6 = sld [smem:[#allocation0]]
  $region73: #{tpu_custom_call.1} parent=0
    _
  %s8 = ssub.s32 1, %s6
  %s9 = scalar_select 0, %s8, %s6
  $region1: #{tpu_custom_call.1} parent=0
    #allocation4 [shape = 'u8[98304]{0}', space=vmem, size = 0x18000, scoped, tag = 'input window, operand 1, single buffered']
    #allocation5 [shape = 's32[2]{0}', space=sflag, size = 0x8, scoped, tag = 'scoped memory for tpu_custom_call.1']
    #allocation6 [shape = 's32[2]{0}', space=sflag, size = 0x8, scoped, tag = 'scoped memory for tpu_custom_call.1']
    #allocation7 [shape = 'u8[98304]{0}', space=vmem, size = 0x18000, scoped, tag = 'input window, operand 3, single buffered']
    #allocation8 [shape = 's32[1]{0}', space=sflag, size = 0x4, scoped, tag = 'scoped memory for tpu_custom_call.1']
    #allocation9 [shape = 'u8[8192]{0}', space=vmem, size = 0x2000, scoped, tag = 'output window, operand 0']
    %10 = vsyncpa [#allocation5], 0
    %11 = vsyncpa [#allocation8], 0
    %12 = vsyncpa [#allocation6], 0
    %s13 = scalar_lea.sflag [#allocation6], 1
    %14 = vsyncpa %s13, 0
    loop: start=0, step=1, limit=4
    $region2: #{tpu_custom_call.1} parent=1 // loop_pre_header
      _
    $region3: #{tpu_custom_call.1} parent=1 // loop_header
      %s16 = sphi 0, %s20
      %p17 = scmp.ge.s32.totalorder %s16, 4
      %s23 = sphi 0, %s35
      %s24 = sphi 0, %s31
      %s25 = sphi 0, %s23
      %s26 = sphi 0, %s24
      %s27 = sphi 0, %s25
      %s28 = sphi 0, %s26
      %s36 = sphi 0, %s36
      %s38 = sphi 0, %s36
      %s39 = sphi 0, %s38
      %s53 = sphi 0, %s39
      %s57 = sphi 0, %s57
      %s59 = sphi 0, %s57
      %s60 = sphi 0, %s59
      %s74 = sphi 0, %s60
      %s78 = sphi 0, %s78
      %s80 = sphi 0, %s78
      %s81 = sphi 0, %s80
      %s95 = sphi 0, %s81
      %s99 = sphi 0, %s99
      %s101 = sphi 0, %s99
      %s102 = sphi 0, %s101
      %s116 = sphi 0, %s102
      %s124 = sphi 0, %s126
      %s127 = sphi 0, %s124
      %s128 = sphi 0, %s127
      %s144 = sphi 0, %s128
    $region4: #{tpu_custom_call.1} parent=1 // loop_header_branch
      %19 = sbr.rel (%p17) target = $region8
    $region5: #{tpu_custom_call.1} parent=1 // loop_body
      %s21 = ssub.s32 %s16, 1
      %s22 = ssub.s32 %s16, 2
      %s29 = sadd.s32 1, %s24
      %p30 = scmp.ge.s32.totalorder %s29, 1
      %s31 = scalar_select %p30, 0, %s29
      %s32 = sadd.s32 1, %s23
      %s33 = scalar_select %p30, %s32, %s23
      %p34 = scmp.ge.s32.totalorder %s33, 2
      %s35 = scalar_select %p34, 0, %s33
      %s37 = sadd.s32 %s36, 1
      %p40 = scmp.eq.s32.totalorder %s16, 1
      %p41 = scmp.ne.s32.totalorder %s36, %s38
      %p42 = scmp.eq.s32.totalorder %s16, 0
      %p43 = por %p41, %p42
      %p44 = scmp.ne.s32.totalorder %s36, %s38
      %p45 = scmp.eq.s32.totalorder %s21, 1
      %p46 = por %p44, %p45
      %p47 = scmp.ne.s32.totalorder %s38, %s39
      %p48 = scmp.eq.s32.totalorder %s21, 0
      %p49 = por %p47, %p48
      %p50 = scmp.ne.s32.totalorder %s38, %s39
      %p51 = scmp.eq.s32.totalorder %s22, 1
      %p52 = por %p50, %p51
      %p54 = scmp.ne.s32.totalorder %s39, %s53
      %p55 = scmp.eq.s32.totalorder %s22, 0
      %p56 = por %p54, %p55
      %s58 = sadd.s32 %s57, 1
      %p61 = scmp.eq.s32.totalorder %s16, 1
      %p62 = scmp.ne.s32.totalorder %s57, %s59
      %p63 = scmp.eq.s32.totalorder %s16, 0
      %p64 = por %p62, %p63
      %p65 = scmp.ne.s32.totalorder %s57, %s59
      %p66 = scmp.eq.s32.totalorder %s21, 1
      %p67 = por %p65, %p66
      %p68 = scmp.ne.s32.totalorder %s59, %s60
      %p69 = scmp.eq.s32.totalorder %s21, 0
      %p70 = por %p68, %p69
      %p71 = scmp.ne.s32.totalorder %s59, %s60
      %p72 = scmp.eq.s32.totalorder %s22, 1
      %p73 = por %p71, %p72
      %p75 = scmp.ne.s32.totalorder %s60, %s74
      %p76 = scmp.eq.s32.totalorder %s22, 0
      %p77 = por %p75, %p76
      %s79 = sadd.s32 %s78, 1
      %p82 = scmp.eq.s32.totalorder %s16, 1
      %p83 = scmp.ne.s32.totalorder %s78, %s80
      %p84 = scmp.eq.s32.totalorder %s16, 0
      %p85 = por %p83, %p84
      %p86 = scmp.ne.s32.totalorder %s78, %s80
      %p87 = scmp.eq.s32.totalorder %s21, 1
      %p88 = por %p86, %p87
      %p89 = scmp.ne.s32.totalorder %s80, %s81
      %p90 = scmp.eq.s32.totalorder %s21, 0
      %p91 = por %p89, %p90
      %p92 = scmp.ne.s32.totalorder %s80, %s81
      %p93 = scmp.eq.s32.totalorder %s22, 1
      %p94 = por %p92, %p93
      %p96 = scmp.ne.s32.totalorder %s81, %s95
      %p97 = scmp.eq.s32.totalorder %s22, 0
      %p98 = por %p96, %p97
      %s100 = sadd.s32 %s99, 1
      %p103 = scmp.eq.s32.totalorder %s16, 1
      %p104 = scmp.ne.s32.totalorder %s99, %s101
      %p105 = scmp.eq.s32.totalorder %s16, 0
      %p106 = por %p104, %p105
      %p107 = scmp.ne.s32.totalorder %s99, %s101
      %p108 = scmp.eq.s32.totalorder %s21, 1
      %p109 = por %p107, %p108
      %p110 = scmp.ne.s32.totalorder %s101, %s102
      %p111 = scmp.eq.s32.totalorder %s21, 0
      %p112 = por %p110, %p111
      %p113 = scmp.ne.s32.totalorder %s101, %s102
      %p114 = scmp.eq.s32.totalorder %s22, 1
      %p115 = por %p113, %p114
      %p117 = scmp.ne.s32.totalorder %s102, %s116
      %p118 = scmp.eq.s32.totalorder %s22, 0
      %p119 = por %p117, %p118
      %s120 = ssub.s32 %s23, %s35
      %s121 = ssub.s32 %s24, %s31
      %s122 = sor.u32 %s120, %s121
      %p123 = scmp.eq.s32.totalorder %s122, 0
      %s125 = sadd.s32 %s124, 1
      %s126 = scalar_select %p123, %s124, %s125
      %p129 = pneg %p123
      %p130 = scmp.eq.s32.totalorder %s16, 1
      %p131 = por %p129, %p130
      %p132 = scmp.ne.s32.totalorder %s124, %s127
      %p133 = scmp.eq.s32.totalorder %s16, 0
      %p134 = por %p132, %p133
      %p135 = scmp.ne.s32.totalorder %s124, %s127
      %p136 = scmp.eq.s32.totalorder %s21, 1
      %p137 = por %p135, %p136
      %p138 = scmp.ne.s32.totalorder %s127, %s128
      %p139 = scmp.eq.s32.totalorder %s21, 0
      %p140 = por %p138, %p139
      %p141 = scmp.ne.s32.totalorder %s127, %s128
      %p142 = scmp.eq.s32.totalorder %s22, 1
      %p143 = por %p141, %p142
      %p145 = scmp.ne.s32.totalorder %s128, %s144
      %p146 = scmp.eq.s32.totalorder %s22, 0
      %p147 = por %p145, %p146
      %p148 = scmp.le.s32.totalorder 1, %s16
      %p149 = scmp.lt.s32.totalorder %s16, 3
      %p150 = pnand %p148, %p149
      %p151 = pneg %p150
      // Predicated region
      $region9: #{tpu_custom_call.1} parent=5 // pred_check
        _
      $region10: #{tpu_custom_call.1} parent=5 // pred_check_branch
        %153 = sbr.rel (%p150) target = $region12
      $region11: #{tpu_custom_call.1} parent=5 // pred_region
        %s154 = ssub.s32 %s16, 1
        // Predicated region
        $region13: #{tpu_custom_call.1} parent=11 // pred_check
          %p155 = pneg %p49
        $region14: #{tpu_custom_call.1} parent=11 // pred_check_branch
          %157 = sbr.rel (%p155) target = $region16
        $region15: #{tpu_custom_call.1} parent=11 // pred_region
          %s159 = ssub.s32 3072, 3072
          %160 = vsyncadd [#allocation5], %s159
          %s161 = sshll.u32 [#allocation4], 4
          %s162 = int_to_ptr.vmem [resolvable:$true] %s161
          %167 = dma.hbm_to_vmem [thread:$0]  %s1, 3072, %s162, [#allocation5], 64, 64, 4
        $region16: #{tpu_custom_call.1} parent=11 // pred_fallthru
          _
        // Predicated region
        $region17: #{tpu_custom_call.1} parent=11 // pred_check
          %p168 = pneg %p70
        $region18: #{tpu_custom_call.1} parent=11 // pred_check_branch
          %170 = sbr.rel (%p168) target = $region20
        $region19: #{tpu_custom_call.1} parent=11 // pred_region
          _
        $region20: #{tpu_custom_call.1} parent=11 // pred_fallthru
          _
        // Predicated region
        $region21: #{tpu_custom_call.1} parent=11 // pred_check
          %p171 = pneg %p91
        $region22: #{tpu_custom_call.1} parent=11 // pred_check_branch
          %173 = sbr.rel (%p171) target = $region24
        $region23: #{tpu_custom_call.1} parent=11 // pred_region
          %s175 = ssub.s32 3072, 3072
          %176 = vsyncadd [#allocation8], %s175
          %s177 = sshll.u32 [#allocation7], 4
          %s178 = int_to_ptr.vmem [resolvable:$true] %s177
          %183 = dma.hbm_to_vmem [thread:$0]  %s3, 3072, %s178, [#allocation8], 64, 64, 4
        $region24: #{tpu_custom_call.1} parent=11 // pred_fallthru
          _
        // Predicated region
        $region25: #{tpu_custom_call.1} parent=11 // pred_check
          %p184 = pneg %p112
        $region26: #{tpu_custom_call.1} parent=11 // pred_check_branch
          %186 = sbr.rel (%p184) target = $region28
        $region27: #{tpu_custom_call.1} parent=11 // pred_region
          _
        $region28: #{tpu_custom_call.1} parent=11 // pred_fallthru
          _
      $region12: #{tpu_custom_call.1} parent=5 // pred_fallthru
        _
      %p187 = scmp.lt.s32.totalorder %s16, 2
      // Predicated region
      $region29: #{tpu_custom_call.1} parent=5 // pred_check
        %p188 = pneg %p187
      $region30: #{tpu_custom_call.1} parent=5 // pred_check_branch
        %190 = sbr.rel (%p188) target = $region32
      $region31: #{tpu_custom_call.1} parent=5 // pred_region
        _
      $region32: #{tpu_custom_call.1} parent=5 // pred_fallthru
        _
      %p191 = scmp.le.s32.totalorder 1, %s16
      %p192 = scmp.lt.s32.totalorder %s16, 3
      %p193 = pnand %p191, %p192
      %p194 = pneg %p193
      // Predicated region
      $region33: #{tpu_custom_call.1} parent=5 // pred_check
        _
      $region34: #{tpu_custom_call.1} parent=5 // pred_check_branch
        %196 = sbr.rel (%p193) target = $region36
      $region35: #{tpu_custom_call.1} parent=5 // pred_region
        %s197 = ssub.s32 %s16, 1
        // Predicated region
        $region37: #{tpu_custom_call.1} parent=35 // pred_check
          %p198 = pneg %p49
        $region38: #{tpu_custom_call.1} parent=35 // pred_check_branch
          %200 = sbr.rel (%p198) target = $region40
        $region39: #{tpu_custom_call.1} parent=35 // pred_region
          %201 = dma.done [#allocation5], 3072
        $region40: #{tpu_custom_call.1} parent=35 // pred_fallthru
          _
        // Predicated region
        $region41: #{tpu_custom_call.1} parent=35 // pred_check
          %p202 = pneg %p91
        $region42: #{tpu_custom_call.1} parent=35 // pred_check_branch
          %204 = sbr.rel (%p202) target = $region44
        $region43: #{tpu_custom_call.1} parent=35 // pred_region
          %205 = dma.done [#allocation8], 3072
        $region44: #{tpu_custom_call.1} parent=35 // pred_fallthru
          _
        %p206 = pneg %p49
        %p207 = pneg %p46
        %p208 = pneg %p70
        %p209 = pneg %p67
        %p210 = pneg %p91
        %p211 = pneg %p88
        %p212 = pneg %p112
        %p213 = pneg %p109
        %p214 = pneg %p140
        %p215 = pneg %p137
        %s216 = sand.u32 %s127, 1
        %s217 = scalar_lea.sflag [#allocation6], %s216
        %s218 = sand.u32 %s127, 1
        %s219 = smul.addr %s218, 8
        %s220 = scalar_lea.vmem [#allocation9], %s219
        %s221 = smul.u32 2, %s26
        %p223 = scmp.lt.s32.totalorder %s26, 0
        %s224 = ssub.s32 0, %s26
        %s225 = scalar_select %p223, %s224, %s26
        %s226 = sand.u32 %s225, 1
        %s227 = ssub.s32 0, %s226
        %s228 = scalar_select %p223, %s227, %s226
        %p229 = scmp.eq.s32.totalorder %s26, 0
        // Predicated region
        $region45: #{tpu_custom_call.1} parent=35 // pred_check
          %p230 = pneg %p229
        $region46: #{tpu_custom_call.1} parent=35 // pred_check_branch
          %232 = sbr.rel (%p230) target = $region48
        $region47: #{tpu_custom_call.1} parent=35 // pred_region
          %s233 = smul.u32 %s25, 4
          %s234 = smul.addr %s233, 64
          %s235 = scalar_lea.hbm %s0, %s234
          // Predicated region
          $region49: #{tpu_custom_call.1} parent=47 // pred_check
            _
          $region50: #{tpu_custom_call.1} parent=47 // pred_check_branch
            %237 = sbr.rel target = $region52
          $region51: #{tpu_custom_call.1} parent=47 // pred_region
            %238 = sst [smem:[#allocation12]] [#allocation11]
            %239 = sst [smem:[#allocation13]] [#allocation10]
          $region52: #{tpu_custom_call.1} parent=47 // pred_fallthru
            _
          %241 = shalt.err (0)
          %s243 = sshll.u32 [#allocation2], 4
          %s244 = int_to_ptr.vmem [resolvable:$true] %s243
          %246 = dma.hbm_to_vmem [thread:$0]  %s235, 256, %s244, [#allocation3]
        $region48: #{tpu_custom_call.1} parent=35 // pred_fallthru
          _
        %s247 = smul.u32 %s228, 2
        %s248 = smul.addr %s247, 8
        %s249 = scalar_lea.vmem [#allocation2], %s248
        %s250 = scalar_lea.sflag [#allocation3], %s228
        %s251 = smul.u32 4, 4
        %s252 = smul.u32 %s251, 1
        %s253 = sshll.u32 %s252, 4
        %254 = dma.done %s250, %s253
        %s255 = sadd.s32 %s26, 1
        %p256 = scmp.lt.s32.totalorder %s255, 1
        // Predicated region
        $region53: #{tpu_custom_call.1} parent=35 // pred_check
          %p257 = pneg %p256
        $region54: #{tpu_custom_call.1} parent=35 // pred_check_branch
          %259 = sbr.rel (%p257) target = $region56
        $region55: #{tpu_custom_call.1} parent=35 // pred_region
          %s260 = smul.u32 %s255, 16
          %s261 = ssub.s32 1, %s228
          %s262 = sshra.s32 %s260, 3
          %s263 = sand.u32 %s260, 7
          %s264 = smul.u32 %s25, 4
          %s265 = sadd.s32 %s262, %s264
          %s266 = smul.addr %s265, 64
          %s267 = scalar_lea.hbm %s0, %s266
          %s268 = smul.u32 %s261, 2
          %s269 = smul.addr %s268, 8
          %s270 = scalar_lea.vmem [#allocation2], %s269
          %s271 = scalar_lea.sflag [#allocation3], %s261
          // Predicated region
          $region57: #{tpu_custom_call.1} parent=55 // pred_check
            _
          $region58: #{tpu_custom_call.1} parent=55 // pred_check_branch
            %273 = sbr.rel target = $region60
          $region59: #{tpu_custom_call.1} parent=55 // pred_region
            %274 = sst [smem:[#allocation12]] [#allocation15]
            %275 = sst [smem:[#allocation13]] [#allocation14]
          $region60: #{tpu_custom_call.1} parent=55 // pred_fallthru
            _
          %277 = shalt.err (0)
          %s279 = sshll.u32 %s270, 4
          %s280 = int_to_ptr.vmem [resolvable:$true] %s279
          %282 = dma.hbm_to_vmem [thread:$0]  %s267, 256, %s280, %s271
        $region56: #{tpu_custom_call.1} parent=35 // pred_fallthru
          _
        %v283 = vld [vmem:[%s249] sm:$0xff]
        %v284 = vld [vmem:[%s249 + $0x8] sm:$0xff]
        %v285 = vld [vmem:[#allocation4] sm:$0xf]
        %v286 = vld [vmem:[#allocation4 + $0x4] sm:$0xf]
        %v287 = vld [vmem:[#allocation4 + $0x8] sm:$0xf]
        %v288 = vld [vmem:[#allocation4 + $0xc] sm:$0xf]
        %v289 = vld [vmem:[#allocation4 + $0x10] sm:$0xf]
        %v290 = vld [vmem:[#allocation4 + $0x14] sm:$0xf]
        %v291 = vld [vmem:[#allocation4 + $0x18] sm:$0xf]
        %v292 = vld [vmem:[#allocation4 + $0x1c] sm:$0xf]
        %v293 = vld [vmem:[#allocation4 + $0x20] sm:$0xf]
        %v294 = vld [vmem:[#allocation4 + $0x24] sm:$0xf]
        %v295 = vld [vmem:[#allocation4 + $0x28] sm:$0xf]
        %v296 = vld [vmem:[#allocation4 + $0x2c] sm:$0xf]
        %v297 = vld [vmem:[#allocation4 + $0x30] sm:$0xf]
        %v298 = vld [vmem:[#allocation4 + $0x34] sm:$0xf]
        %v299 = vld [vmem:[#allocation4 + $0x38] sm:$0xf]
        %v300 = vld [vmem:[#allocation4 + $0x3c] sm:$0xf]
        %v301 = vld [vmem:[#allocation4 + $0x40] sm:$0xf]
        %v302 = vld [vmem:[#allocation4 + $0x44] sm:$0xf]
        %v303 = vld [vmem:[#allocation4 + $0x48] sm:$0xf]
        %v304 = vld [vmem:[#allocation4 + $0x4c] sm:$0xf]
        %v305 = vld [vmem:[#allocation4 + $0x50] sm:$0xf]
        %v306 = vld [vmem:[#allocation4 + $0x54] sm:$0xf]
        %v307 = vld [vmem:[#allocation4 + $0x58] sm:$0xf]
        %v308 = vld [vmem:[#allocation4 + $0x5c] sm:$0xf]
        %v309 = vld [vmem:[#allocation4 + $0x60] sm:$0xf]
        %v310 = vld [vmem:[#allocation4 + $0x64] sm:$0xf]
        %v311 = vld [vmem:[#allocation4 + $0x68] sm:$0xf]
        %v312 = vld [vmem:[#allocation4 + $0x6c] sm:$0xf]
        %v313 = vld [vmem:[#allocation4 + $0x70] sm:$0xf]
        %v314 = vld [vmem:[#allocation4 + $0x74] sm:$0xf]
        %v315 = vld [vmem:[#allocation4 + $0x78] sm:$0xf]
        %v316 = vld [vmem:[#allocation4 + $0x7c] sm:$0xf]
        %vm317 = vsmask.f32 7424
        %v319 = vshrl.u32 %v283, 16
        %v321 = vshll.u32 %v283, 16
        %v323 = vrot.slane %v321, 1
        %v324 = vor.u32 %v319, %v323
        %v326 = vshll.u32 %v284, 16
        %v328 = vrot.slane %v326, 1
        %v329 = vsel %vm317, %v324, %v328
        %v330 = vshrl.u32 %v284, 16
        %v332 = vor.u32 %v330, %v328
        %v351 = vunpack.c.l.b16 %v301
        %v352 = vunpack.c.l.b16 %v302
        %v353 = vunpack.c.l.b16 %v303
        %v354 = vunpack.c.l.b16 %v304
        %v355 = vunpack.c.l.b16 %v305
        %v356 = vunpack.c.l.b16 %v306
        %v357 = vunpack.c.l.b16 %v307
        %v358 = vunpack.c.l.b16 %v308
        %v359 = vunpack.c.l.b16 %v309
        %v360 = vunpack.c.l.b16 %v310
        %v361 = vunpack.c.l.b16 %v311
        %v362 = vunpack.c.l.b16 %v312
        %v363 = vunpack.c.l.b16 %v313
        %v364 = vunpack.c.l.b16 %v314
        %v365 = vunpack.c.l.b16 %v315
        %v366 = vunpack.c.l.b16 %v316
        %v367 = vpack.c.b16 %v352, %v351
        %v368 = vpack.c.b16 %v354, %v353
        %v369 = vpack.c.b16 %v356, %v355
        %v370 = vpack.c.b16 %v358, %v357
        %v371 = vpack.c.b16 %v360, %v359
        %v372 = vpack.c.b16 %v362, %v361
        %v373 = vpack.c.b16 %v364, %v363
        %v374 = vpack.c.b16 %v366, %v365
        %383 = vmatprep.subr.bf16.mxu0 0
        %384 = vmatpush1.bf16.msra.mxu0 %v367
        %385 = vmatprep.subr.bf16.mxu0 0
        %386 = vmatpush1.bf16.msra.mxu0 %v368
        %387 = vmatprep.subr.bf16.mxu0 0
        %388 = vmatpush1.bf16.msra.mxu0 %v369
        %389 = vmatprep.subr.bf16.mxu0 0
        %390 = vmatpush1.bf16.msra.mxu0 %v370
        %391 = vmatprep.subr.bf16.mxu0 0
        %392 = vmatpush1.bf16.msra.mxu0 %v371
        %393 = vmatprep.subr.bf16.mxu0 0
        %394 = vmatpush1.bf16.msra.mxu0 %v372
        %395 = vmatprep.subr.bf16.mxu0 0
        %396 = vmatpush1.bf16.msra.mxu0 %v373
        %397 = vmatprep.subr.bf16.mxu0 0
        %398 = vmatpush1.bf16.msra.mxu0 %v374
        %399 = vmatprep.subr.bf16.mxu0 0
        %400 = vmatpush1.bf16.msra.mxu0 0
        %401 = vmatprep.subr.bf16.mxu0 0
        %402 = vmatpush1.bf16.msra.mxu0 0
        %403 = vmatprep.subr.bf16.mxu0 0
        %404 = vmatpush1.bf16.msra.mxu0 0
        %405 = vmatprep.subr.bf16.mxu0 0
        %406 = vmatpush1.bf16.msra.mxu0 0
        %407 = vmatprep.subr.bf16.mxu0 0
        %408 = vmatpush1.bf16.msra.mxu0 0
        %409 = vmatprep.subr.bf16.mxu0 0
        %410 = vmatpush1.bf16.msra.mxu0 0
        %411 = vmatprep.subr.bf16.mxu0 0
        %412 = vmatpush1.bf16.msra.mxu0 0
        %413 = vmatprep.subr.bf16.mxu0 0
        %414 = vmatpush1.bf16.msra.mxu0 0
        %415 = vmatprep.mubr.bf16.mxu0 0
        %416 = vmatmul.mubr.bf16.gmra.mrb[0].mxu0 %v329
        %v417 = vpop.f32.mrb[0].mxu0
        %v418 = vadd.f32 0.0, %v417
        %v419 = vpop.f32.mrb[0].mxu0
        %v420 = vpop.f32.mrb[0].mxu0
        %v421 = vadd.f32 0.0, %v420
        %v422 = vpop.f32.mrb[0].mxu0
        %423 = vmatprep.mubr.bf16.mxu0 0
        %424 = vmatmul.mubr.bf16.gmra.mrb[0].mxu0 %v332
        %v425 = vpop.f32.mrb[0].mxu0
        %v426 = vadd.f32 0.0, %v425
        %v427 = vpop.f32.mrb[0].mxu0
        %v428 = vpop.f32.mrb[0].mxu0
        %v429 = vpop.f32.mrb[0].mxu0
        %430 = vdwg.mxu0
        %v447 = vunpack.c.l.b16 %v285
        %v448 = vunpack.c.l.b16 %v286
        %v449 = vunpack.c.l.b16 %v287
        %v450 = vunpack.c.l.b16 %v288
        %v451 = vunpack.c.l.b16 %v289
        %v452 = vunpack.c.l.b16 %v290
        %v453 = vunpack.c.l.b16 %v291
        %v454 = vunpack.c.l.b16 %v292
        %v455 = vunpack.c.l.b16 %v293
        %v456 = vunpack.c.l.b16 %v294
        %v457 = vunpack.c.l.b16 %v295
        %v458 = vunpack.c.l.b16 %v296
        %v459 = vunpack.c.l.b16 %v297
        %v460 = vunpack.c.l.b16 %v298
        %v461 = vunpack.c.l.b16 %v299
        %v462 = vunpack.c.l.b16 %v300
        %v463 = vpack.c.b16 %v448, %v447
        %v464 = vpack.c.b16 %v450, %v449
        %v465 = vpack.c.b16 %v452, %v451
        %v466 = vpack.c.b16 %v454, %v453
        %v467 = vpack.c.b16 %v456, %v455
        %v468 = vpack.c.b16 %v458, %v457
        %v469 = vpack.c.b16 %v460, %v459
        %v470 = vpack.c.b16 %v462, %v461
        %479 = vmatprep.subr.bf16.mxu0 0
        %480 = vmatpush1.bf16.msra.mxu0 %v463
        %481 = vmatprep.subr.bf16.mxu0 0
        %482 = vmatpush1.bf16.msra.mxu0 %v464
        %483 = vmatprep.subr.bf16.mxu0 0
        %484 = vmatpush1.bf16.msra.mxu0 %v465
        %485 = vmatprep.subr.bf16.mxu0 0
        %486 = vmatpush1.bf16.msra.mxu0 %v466
        %487 = vmatprep.subr.bf16.mxu0 0
        %488 = vmatpush1.bf16.msra.mxu0 %v467
        %489 = vmatprep.subr.bf16.mxu0 0
        %490 = vmatpush1.bf16.msra.mxu0 %v468
        %491 = vmatprep.subr.bf16.mxu0 0
        %492 = vmatpush1.bf16.msra.mxu0 %v469
        %493 = vmatprep.subr.bf16.mxu0 0
        %494 = vmatpush1.bf16.msra.mxu0 %v470
        %495 = vmatprep.subr.bf16.mxu0 0
        %496 = vmatpush1.bf16.msra.mxu0 0
        %497 = vmatprep.subr.bf16.mxu0 0
        %498 = vmatpush1.bf16.msra.mxu0 0
        %499 = vmatprep.subr.bf16.mxu0 0
        %500 = vmatpush1.bf16.msra.mxu0 0
        %501 = vmatprep.subr.bf16.mxu0 0
        %502 = vmatpush1.bf16.msra.mxu0 0
        %503 = vmatprep.subr.bf16.mxu0 0
        %504 = vmatpush1.bf16.msra.mxu0 0
        %505 = vmatprep.subr.bf16.mxu0 0
        %506 = vmatpush1.bf16.msra.mxu0 0
        %507 = vmatprep.subr.bf16.mxu0 0
        %508 = vmatpush1.bf16.msra.mxu0 0
        %509 = vmatprep.subr.bf16.mxu0 0
        %510 = vmatpush1.bf16.msra.mxu0 0
        %511 = vmatprep.mubr.bf16.mxu0 0
        %512 = vmatmul.mubr.bf16.gmra.mrb[0].mxu0 %v283
        %v513 = vpop.f32.mrb[0].mxu0
        %v514 = vadd.f32 %v418, %v513
        %v515 = vpop.f32.mrb[0].mxu0
        %v516 = vpop.f32.mrb[0].mxu0
        %v517 = vadd.f32 %v421, %v516
        %v518 = vpop.f32.mrb[0].mxu0
        %519 = vmatprep.mubr.bf16.mxu0 0
        %520 = vmatmul.mubr.bf16.gmra.mrb[0].mxu0 %v284
        %v521 = vpop.f32.mrb[0].mxu0
        %v522 = vadd.f32 %v426, %v521
        %v523 = vpop.f32.mrb[0].mxu0
        %v524 = vpop.f32.mrb[0].mxu0
        %v525 = vpop.f32.mrb[0].mxu0
        %526 = vdwg.mxu0
        %v527 = vld [vmem:[#allocation4 + $0x80] sm:$0xf]
        %v528 = vld [vmem:[#allocation4 + $0x84] sm:$0xf]
        %v529 = vld [vmem:[#allocation4 + $0x88] sm:$0xf]
        %v530 = vld [vmem:[#allocation4 + $0x8c] sm:$0xf]
        %v531 = vld [vmem:[#allocation4 + $0x90] sm:$0xf]
        %v532 = vld [vmem:[#allocation4 + $0x94] sm:$0xf]
        %v533 = vld [vmem:[#allocation4 + $0x98] sm:$0xf]
        %v534 = vld [vmem:[#allocation4 + $0x9c] sm:$0xf]
        %v535 = vld [vmem:[#allocation4 + $0xa0] sm:$0xf]
        %v536 = vld [vmem:[#allocation4 + $0xa4] sm:$0xf]
        %v537 = vld [vmem:[#allocation4 + $0xa8] sm:$0xf]
        %v538 = vld [vmem:[#allocation4 + $0xac] sm:$0xf]
        %v539 = vld [vmem:[#allocation4 + $0xb0] sm:$0xf]
        %v540 = vld [vmem:[#allocation4 + $0xb4] sm:$0xf]
        %v541 = vld [vmem:[#allocation4 + $0xb8] sm:$0xf]
        %v542 = vld [vmem:[#allocation4 + $0xbc] sm:$0xf]
        %vm545 = vcmask 1046528
        %v546 = vrot.slane %v283, 1
        %v547 = vrot.slane %v284, 1
        %v548 = vsel %vm545, %v546, %v547
        %v567 = vunpack.c.l.b16 %v527
        %v568 = vunpack.c.l.b16 %v528
        %v569 = vunpack.c.l.b16 %v529
        %v570 = vunpack.c.l.b16 %v530
        %v571 = vunpack.c.l.b16 %v531
        %v572 = vunpack.c.l.b16 %v532
        %v573 = vunpack.c.l.b16 %v533
        %v574 = vunpack.c.l.b16 %v534
        %v575 = vunpack.c.l.b16 %v535
        %v576 = vunpack.c.l.b16 %v536
        %v577 = vunpack.c.l.b16 %v537
        %v578 = vunpack.c.l.b16 %v538
        %v579 = vunpack.c.l.b16 %v539
        %v580 = vunpack.c.l.b16 %v540
        %v581 = vunpack.c.l.b16 %v541
        %v582 = vunpack.c.l.b16 %v542
        %v583 = vpack.c.b16 %v568, %v567
        %v584 = vpack.c.b16 %v570, %v569
        %v585 = vpack.c.b16 %v572, %v571
        %v586 = vpack.c.b16 %v574, %v573
        %v587 = vpack.c.b16 %v576, %v575
        %v588 = vpack.c.b16 %v578, %v577
        %v589 = vpack.c.b16 %v580, %v579
        %v590 = vpack.c.b16 %v582, %v581
        %599 = vmatprep.subr.bf16.mxu0 0
        %600 = vmatpush1.bf16.msra.mxu0 %v583
        %601 = vmatprep.subr.bf16.mxu0 0
        %602 = vmatpush1.bf16.msra.mxu0 %v584
        %603 = vmatprep.subr.bf16.mxu0 0
        %604 = vmatpush1.bf16.msra.mxu0 %v585
        %605 = vmatprep.subr.bf16.mxu0 0
        %606 = vmatpush1.bf16.msra.mxu0 %v586
        %607 = vmatprep.subr.bf16.mxu0 0
        %608 = vmatpush1.bf16.msra.mxu0 %v587
        %609 = vmatprep.subr.bf16.mxu0 0
        %610 = vmatpush1.bf16.msra.mxu0 %v588
        %611 = vmatprep.subr.bf16.mxu0 0
        %612 = vmatpush1.bf16.msra.mxu0 %v589
        %613 = vmatprep.subr.bf16.mxu0 0
        %614 = vmatpush1.bf16.msra.mxu0 %v590
        %615 = vmatprep.subr.bf16.mxu0 0
        %616 = vmatpush1.bf16.msra.mxu0 0
        %617 = vmatprep.subr.bf16.mxu0 0
        %618 = vmatpush1.bf16.msra.mxu0 0
        %619 = vmatprep.subr.bf16.mxu0 0
        %620 = vmatpush1.bf16.msra.mxu0 0
        %621 = vmatprep.subr.bf16.mxu0 0
        %622 = vmatpush1.bf16.msra.mxu0 0
        %623 = vmatprep.subr.bf16.mxu0 0
        %624 = vmatpush1.bf16.msra.mxu0 0
        %625 = vmatprep.subr.bf16.mxu0 0
        %626 = vmatpush1.bf16.msra.mxu0 0
        %627 = vmatprep.subr.bf16.mxu0 0
        %628 = vmatpush1.bf16.msra.mxu0 0
        %629 = vmatprep.subr.bf16.mxu0 0
        %630 = vmatpush1.bf16.msra.mxu0 0
        %631 = vmatprep.mubr.bf16.mxu0 0
        %632 = vmatmul.mubr.bf16.gmra.mrb[0].mxu0 %v548
        %v633 = vpop.f32.mrb[0].mxu0
        %v634 = vadd.f32 0.0, %v633
        %v635 = vpop.f32.mrb[0].mxu0
        %v636 = vpop.f32.mrb[0].mxu0
        %v637 = vadd.f32 0.0, %v636
        %v638 = vpop.f32.mrb[0].mxu0
        %639 = vmatprep.mubr.bf16.mxu0 0
        %640 = vmatmul.mubr.bf16.gmra.mrb[0].mxu0 %v547
        %v641 = vpop.f32.mrb[0].mxu0
        %v642 = vadd.f32 0.0, %v641
        %v643 = vpop.f32.mrb[0].mxu0
        %v644 = vpop.f32.mrb[0].mxu0
        %v645 = vpop.f32.mrb[0].mxu0
        %646 = vdwg.mxu0
        %v647 = vadd.f32 %v514, %v634
        %v648 = vadd.f32 %v517, %v637
        %v649 = vadd.f32 %v522, %v642
        %v650 = vld [vmem:[%s2] sm:$0x1]
        %v652 = vlaneseq
        %v653 = vshrl.u32 %v652, 7
        %v654 = vsub.s32 0, %v653
        %v655 = vrot.slane %v650, %v654
        %v657 = vadd.f32 %v647, %v655
        %v658 = vadd.f32 %v648, %v655
        %v659 = vadd.f32 %v649, %v655
        %v660 = vmax.f32 %v657, 0.0
        %v661 = vmax.f32 %v658, 0.0
        %v662 = vmax.f32 %v659, 0.0
        %v663 = vlaneseq
        %v664 = vshrl.u32 %v663, 7
        %v665 = vadd.s32 %v664, 8
        %v666 = vadd.s32 %v664, 16
        %s667 = smul.u32 %s26, 16
        %s668 = ssub.s32 %s667, 1
        %v669 = vstv %s668
        %v670 = vadd.s32 %v669, %v664
        %v671 = vadd.s32 %v669, %v665
        %v672 = vadd.s32 %v669, %v666
        %vm673 = vcmp.ge.s32.totalorder %v670, 0
        %vm674 = vcmp.ge.s32.totalorder %v671, 0
        %vm675 = vcmp.ge.s32.totalorder %v672, 0
        %vm676 = vcmp.lt.s32.totalorder %v670, 16
        %vm677 = vcmp.lt.s32.totalorder %v671, 16
        %vm678 = vcmp.lt.s32.totalorder %v672, 16
        %vm679 = vmand %vm673, %vm676
        %vm680 = vmand %vm674, %vm677
        %vm681 = vmand %vm675, %vm678
        %v682 = vsel %vm679, 1, 0
        %v683 = vsel %vm680, 1, 0
        %v684 = vsel %vm681, 1, 0
        %vm685 = vcmp.eq.s32.totalorder %v682, 1
        %vm686 = vcmp.eq.s32.totalorder %v683, 1
        %vm687 = vcmp.eq.s32.totalorder %v684, 1
        %v688 = vsel %vm685, %v660, 0.0
        %v689 = vsel %vm686, %v661, 0.0
        %v690 = vsel %vm687, %v662, 0.0
        %v691 = vpack.c.bf16 %v689, %v688
        %v692 = vpack.c.bf16 %v690, %v690
        %v693 = vld [vmem:[#allocation7] sm:$0xf]
        %v694 = vld [vmem:[#allocation7 + $0x4] sm:$0xf]
        %v695 = vld [vmem:[#allocation7 + $0x8] sm:$0xf]
        %v696 = vld [vmem:[#allocation7 + $0xc] sm:$0xf]
        %v697 = vld [vmem:[#allocation7 + $0x10] sm:$0xf]
        %v698 = vld [vmem:[#allocation7 + $0x14] sm:$0xf]
        %v699 = vld [vmem:[#allocation7 + $0x18] sm:$0xf]
        %v700 = vld [vmem:[#allocation7 + $0x1c] sm:$0xf]
        %v701 = vld [vmem:[#allocation7 + $0x20] sm:$0xf]
        %v702 = vld [vmem:[#allocation7 + $0x24] sm:$0xf]
        %v703 = vld [vmem:[#allocation7 + $0x28] sm:$0xf]
        %v704 = vld [vmem:[#allocation7 + $0x2c] sm:$0xf]
        %v705 = vld [vmem:[#allocation7 + $0x30] sm:$0xf]
        %v706 = vld [vmem:[#allocation7 + $0x34] sm:$0xf]
        %v707 = vld [vmem:[#allocation7 + $0x38] sm:$0xf]
        %v708 = vld [vmem:[#allocation7 + $0x3c] sm:$0xf]
        %v709 = vld [vmem:[#allocation7 + $0x40] sm:$0xf]
        %v710 = vld [vmem:[#allocation7 + $0x44] sm:$0xf]
        %v711 = vld [vmem:[#allocation7 + $0x48] sm:$0xf]
        %v712 = vld [vmem:[#allocation7 + $0x4c] sm:$0xf]
        %v713 = vld [vmem:[#allocation7 + $0x50] sm:$0xf]
        %v714 = vld [vmem:[#allocation7 + $0x54] sm:$0xf]
        %v715 = vld [vmem:[#allocation7 + $0x58] sm:$0xf]
        %v716 = vld [vmem:[#allocation7 + $0x5c] sm:$0xf]
        %v717 = vld [vmem:[#allocation7 + $0x60] sm:$0xf]
        %v718 = vld [vmem:[#allocation7 + $0x64] sm:$0xf]
        %v719 = vld [vmem:[#allocation7 + $0x68] sm:$0xf]
        %v720 = vld [vmem:[#allocation7 + $0x6c] sm:$0xf]
        %v721 = vld [vmem:[#allocation7 + $0x70] sm:$0xf]
        %v722 = vld [vmem:[#allocation7 + $0x74] sm:$0xf]
        %v723 = vld [vmem:[#allocation7 + $0x78] sm:$0xf]
        %v724 = vld [vmem:[#allocation7 + $0x7c] sm:$0xf]
        %v726 = vshrl.u32 %v691, 16
        %v728 = vshll.u32 %v691, 16
        %v730 = vrot.slane %v728, 1
        %v731 = vor.u32 %v726, %v730
        %v733 = vshll.u32 %v692, 16
        %v735 = vrot.slane %v733, 1
        %v736 = vsel %vm317, %v731, %v735
        %v754 = vunpack.c.l.b16 %v709
        %v755 = vunpack.c.l.b16 %v710
        %v756 = vunpack.c.l.b16 %v711
        %v757 = vunpack.c.l.b16 %v712
        %v758 = vunpack.c.l.b16 %v713
        %v759 = vunpack.c.l.b16 %v714
        %v760 = vunpack.c.l.b16 %v715
        %v761 = vunpack.c.l.b16 %v716
        %v762 = vunpack.c.l.b16 %v717
        %v763 = vunpack.c.l.b16 %v718
        %v764 = vunpack.c.l.b16 %v719
        %v765 = vunpack.c.l.b16 %v720
        %v766 = vunpack.c.l.b16 %v721
        %v767 = vunpack.c.l.b16 %v722
        %v768 = vunpack.c.l.b16 %v723
        %v769 = vunpack.c.l.b16 %v724
        %v770 = vpack.c.b16 %v755, %v754
        %v771 = vpack.c.b16 %v757, %v756
        %v772 = vpack.c.b16 %v759, %v758
        %v773 = vpack.c.b16 %v761, %v760
        %v774 = vpack.c.b16 %v763, %v762
        %v775 = vpack.c.b16 %v765, %v764
        %v776 = vpack.c.b16 %v767, %v766
        %v777 = vpack.c.b16 %v769, %v768
        %786 = vmatprep.subr.bf16.mxu0 0
        %787 = vmatpush1.bf16.msra.mxu0 %v770
        %788 = vmatprep.subr.bf16.mxu0 0
        %789 = vmatpush1.bf16.msra.mxu0 %v771
        %790 = vmatprep.subr.bf16.mxu0 0
        %791 = vmatpush1.bf16.msra.mxu0 %v772
        %792 = vmatprep.subr.bf16.mxu0 0
        %793 = vmatpush1.bf16.msra.mxu0 %v773
        %794 = vmatprep.subr.bf16.mxu0 0
        %795 = vmatpush1.bf16.msra.mxu0 %v774
        %796 = vmatprep.subr.bf16.mxu0 0
        %797 = vmatpush1.bf16.msra.mxu0 %v775
        %798 = vmatprep.subr.bf16.mxu0 0
        %799 = vmatpush1.bf16.msra.mxu0 %v776
        %800 = vmatprep.subr.bf16.mxu0 0
        %801 = vmatpush1.bf16.msra.mxu0 %v777
        %802 = vmatprep.subr.bf16.mxu0 0
        %803 = vmatpush1.bf16.msra.mxu0 0
        %804 = vmatprep.subr.bf16.mxu0 0
        %805 = vmatpush1.bf16.msra.mxu0 0
        %806 = vmatprep.subr.bf16.mxu0 0
        %807 = vmatpush1.bf16.msra.mxu0 0
        %808 = vmatprep.subr.bf16.mxu0 0
        %809 = vmatpush1.bf16.msra.mxu0 0
        %810 = vmatprep.subr.bf16.mxu0 0
        %811 = vmatpush1.bf16.msra.mxu0 0
        %812 = vmatprep.subr.bf16.mxu0 0
        %813 = vmatpush1.bf16.msra.mxu0 0
        %814 = vmatprep.subr.bf16.mxu0 0
        %815 = vmatpush1.bf16.msra.mxu0 0
        %816 = vmatprep.subr.bf16.mxu0 0
        %817 = vmatpush1.bf16.msra.mxu0 0
        %818 = vmatprep.mubr.bf16.mxu0 0
        %819 = vmatmul.mubr.bf16.gmra.mrb[0].mxu0 %v736
        %v820 = vpop.f32.mrb[0].mxu0
        %v821 = vadd.f32 0.0, %v820
        %v822 = vpop.f32.mrb[0].mxu0
        %v823 = vpop.f32.mrb[0].mxu0
        %v824 = vadd.f32 0.0, %v823
        %v825 = vpop.f32.mrb[0].mxu0
        %826 = vdwg.mxu0
        %v843 = vunpack.c.l.b16 %v693
        %v844 = vunpack.c.l.b16 %v694
        %v845 = vunpack.c.l.b16 %v695
        %v846 = vunpack.c.l.b16 %v696
        %v847 = vunpack.c.l.b16 %v697
        %v848 = vunpack.c.l.b16 %v698
        %v849 = vunpack.c.l.b16 %v699
        %v850 = vunpack.c.l.b16 %v700
        %v851 = vunpack.c.l.b16 %v701
        %v852 = vunpack.c.l.b16 %v702
        %v853 = vunpack.c.l.b16 %v703
        %v854 = vunpack.c.l.b16 %v704
        %v855 = vunpack.c.l.b16 %v705
        %v856 = vunpack.c.l.b16 %v706
        %v857 = vunpack.c.l.b16 %v707
        %v858 = vunpack.c.l.b16 %v708
        %v859 = vpack.c.b16 %v844, %v843
        %v860 = vpack.c.b16 %v846, %v845
        %v861 = vpack.c.b16 %v848, %v847
        %v862 = vpack.c.b16 %v850, %v849
        %v863 = vpack.c.b16 %v852, %v851
        %v864 = vpack.c.b16 %v854, %v853
        %v865 = vpack.c.b16 %v856, %v855
        %v866 = vpack.c.b16 %v858, %v857
        %875 = vmatprep.subr.bf16.mxu0 0
        %876 = vmatpush1.bf16.msra.mxu0 %v859
        %877 = vmatprep.subr.bf16.mxu0 0
        %878 = vmatpush1.bf16.msra.mxu0 %v860
        %879 = vmatprep.subr.bf16.mxu0 0
        %880 = vmatpush1.bf16.msra.mxu0 %v861
        %881 = vmatprep.subr.bf16.mxu0 0
        %882 = vmatpush1.bf16.msra.mxu0 %v862
        %883 = vmatprep.subr.bf16.mxu0 0
        %884 = vmatpush1.bf16.msra.mxu0 %v863
        %885 = vmatprep.subr.bf16.mxu0 0
        %886 = vmatpush1.bf16.msra.mxu0 %v864
        %887 = vmatprep.subr.bf16.mxu0 0
        %888 = vmatpush1.bf16.msra.mxu0 %v865
        %889 = vmatprep.subr.bf16.mxu0 0
        %890 = vmatpush1.bf16.msra.mxu0 %v866
        %891 = vmatprep.subr.bf16.mxu0 0
        %892 = vmatpush1.bf16.msra.mxu0 0
        %893 = vmatprep.subr.bf16.mxu0 0
        %894 = vmatpush1.bf16.msra.mxu0 0
        %895 = vmatprep.subr.bf16.mxu0 0
        %896 = vmatpush1.bf16.msra.mxu0 0
        %897 = vmatprep.subr.bf16.mxu0 0
        %898 = vmatpush1.bf16.msra.mxu0 0
        %899 = vmatprep.subr.bf16.mxu0 0
        %900 = vmatpush1.bf16.msra.mxu0 0
        %901 = vmatprep.subr.bf16.mxu0 0
        %902 = vmatpush1.bf16.msra.mxu0 0
        %903 = vmatprep.subr.bf16.mxu0 0
        %904 = vmatpush1.bf16.msra.mxu0 0
        %905 = vmatprep.subr.bf16.mxu0 0
        %906 = vmatpush1.bf16.msra.mxu0 0
        %907 = vmatprep.mubr.bf16.mxu0 0
        %908 = vmatmul.mubr.bf16.gmra.mrb[0].mxu0 %v691
        %v909 = vpop.f32.mrb[0].mxu0
        %v910 = vadd.f32 %v821, %v909
        %v911 = vpop.f32.mrb[0].mxu0
        %v912 = vpop.f32.mrb[0].mxu0
        %v913 = vadd.f32 %v824, %v912
        %v914 = vpop.f32.mrb[0].mxu0
        %915 = vdwg.mxu0
        %v916 = vld [vmem:[#allocation7 + $0x80] sm:$0xf]
        %v917 = vld [vmem:[#allocation7 + $0x84] sm:$0xf]
        %v918 = vld [vmem:[#allocation7 + $0x88] sm:$0xf]
        %v919 = vld [vmem:[#allocation7 + $0x8c] sm:$0xf]
        %v920 = vld [vmem:[#allocation7 + $0x90] sm:$0xf]
        %v921 = vld [vmem:[#allocation7 + $0x94] sm:$0xf]
        %v922 = vld [vmem:[#allocation7 + $0x98] sm:$0xf]
        %v923 = vld [vmem:[#allocation7 + $0x9c] sm:$0xf]
        %v924 = vld [vmem:[#allocation7 + $0xa0] sm:$0xf]
        %v925 = vld [vmem:[#allocation7 + $0xa4] sm:$0xf]
        %v926 = vld [vmem:[#allocation7 + $0xa8] sm:$0xf]
        %v927 = vld [vmem:[#allocation7 + $0xac] sm:$0xf]
        %v928 = vld [vmem:[#allocation7 + $0xb0] sm:$0xf]
        %v929 = vld [vmem:[#allocation7 + $0xb4] sm:$0xf]
        %v930 = vld [vmem:[#allocation7 + $0xb8] sm:$0xf]
        %v931 = vld [vmem:[#allocation7 + $0xbc] sm:$0xf]
        %v934 = vrot.slane %v691, 1
        %v935 = vrot.slane %v692, 1
        %v936 = vsel %vm545, %v934, %v935
        %v954 = vunpack.c.l.b16 %v916
        %v955 = vunpack.c.l.b16 %v917
        %v956 = vunpack.c.l.b16 %v918
        %v957 = vunpack.c.l.b16 %v919
        %v958 = vunpack.c.l.b16 %v920
        %v959 = vunpack.c.l.b16 %v921
        %v960 = vunpack.c.l.b16 %v922
        %v961 = vunpack.c.l.b16 %v923
        %v962 = vunpack.c.l.b16 %v924
        %v963 = vunpack.c.l.b16 %v925
        %v964 = vunpack.c.l.b16 %v926
        %v965 = vunpack.c.l.b16 %v927
        %v966 = vunpack.c.l.b16 %v928
        %v967 = vunpack.c.l.b16 %v929
        %v968 = vunpack.c.l.b16 %v930
        %v969 = vunpack.c.l.b16 %v931
        %v970 = vpack.c.b16 %v955, %v954
        %v971 = vpack.c.b16 %v957, %v956
        %v972 = vpack.c.b16 %v959, %v958
        %v973 = vpack.c.b16 %v961, %v960
        %v974 = vpack.c.b16 %v963, %v962
        %v975 = vpack.c.b16 %v965, %v964
        %v976 = vpack.c.b16 %v967, %v966
        %v977 = vpack.c.b16 %v969, %v968
        %986 = vmatprep.subr.bf16.mxu0 0
        %987 = vmatpush1.bf16.msra.mxu0 %v970
        %988 = vmatprep.subr.bf16.mxu0 0
        %989 = vmatpush1.bf16.msra.mxu0 %v971
        %990 = vmatprep.subr.bf16.mxu0 0
        %991 = vmatpush1.bf16.msra.mxu0 %v972
        %992 = vmatprep.subr.bf16.mxu0 0
        %993 = vmatpush1.bf16.msra.mxu0 %v973
        %994 = vmatprep.subr.bf16.mxu0 0
        %995 = vmatpush1.bf16.msra.mxu0 %v974
        %996 = vmatprep.subr.bf16.mxu0 0
        %997 = vmatpush1.bf16.msra.mxu0 %v975
        %998 = vmatprep.subr.bf16.mxu0 0
        %999 = vmatpush1.bf16.msra.mxu0 %v976
        %1000 = vmatprep.subr.bf16.mxu0 0
        %1001 = vmatpush1.bf16.msra.mxu0 %v977
        %1002 = vmatprep.subr.bf16.mxu0 0
        %1003 = vmatpush1.bf16.msra.mxu0 0
        %1004 = vmatprep.subr.bf16.mxu0 0
        %1005 = vmatpush1.bf16.msra.mxu0 0
        %1006 = vmatprep.subr.bf16.mxu0 0
        %1007 = vmatpush1.bf16.msra.mxu0 0
        %1008 = vmatprep.subr.bf16.mxu0 0
        %1009 = vmatpush1.bf16.msra.mxu0 0
        %1010 = vmatprep.subr.bf16.mxu0 0
        %1011 = vmatpush1.bf16.msra.mxu0 0
        %1012 = vmatprep.subr.bf16.mxu0 0
        %1013 = vmatpush1.bf16.msra.mxu0 0
        %1014 = vmatprep.subr.bf16.mxu0 0
        %1015 = vmatpush1.bf16.msra.mxu0 0
        %1016 = vmatprep.subr.bf16.mxu0 0
        %1017 = vmatpush1.bf16.msra.mxu0 0
        %1018 = vmatprep.mubr.bf16.mxu0 0
        %1019 = vmatmul.mubr.bf16.gmra.mrb[0].mxu0 %v936
        %v1020 = vpop.f32.mrb[0].mxu0
        %v1021 = vadd.f32 0.0, %v1020
        %v1022 = vpop.f32.mrb[0].mxu0
        %v1023 = vpop.f32.mrb[0].mxu0
        %v1024 = vadd.f32 0.0, %v1023
        %v1025 = vpop.f32.mrb[0].mxu0
        %1026 = vdwg.mxu0
        %v1027 = vadd.f32 %v910, %v1021
        %v1028 = vadd.f32 %v913, %v1024
        %v1029 = vld [vmem:[%s4] sm:$0x1]
        %v1031 = vlaneseq
        %v1032 = vshrl.u32 %v1031, 7
        %v1033 = vsub.s32 0, %v1032
        %v1034 = vrot.slane %v1029, %v1033
        %v1036 = vadd.f32 %v1027, %v1034
        %v1037 = vadd.f32 %v1028, %v1034
        %v1038 = vmax.f32 %v1036, 0.0
        %v1039 = vmax.f32 %v1037, 0.0
        %v1040 = vpack.c.bf16 %v1039, %v1038
        %v1042 = vunpack.c.l.b16 %v1040
        %v1043 = vunpack.c.h.b16 %v1040
        %v1044 = vpack.c.b16 %v1042, %v1042
        %v1045 = vpack.c.b16 %v1043, %v1043
        %1048 = vst [vmem:[%s220] sm:$0xf] %v1044
        %1049 = vst [vmem:[%s220 + $0x4] sm:$0xf] %v1045
        %s1050 = sand.u32 %s127, 1
        %s1051 = scalar_lea.sflag [#allocation6], %s1050
        %s1052 = sand.u32 %s127, 1
        %s1053 = smul.addr %s1052, 8
        %s1054 = scalar_lea.vmem [#allocation9], %s1053
        // Predicated region
        $region61: #{tpu_custom_call.1} parent=35 // pred_check
          %p1055 = pneg %p137
        $region62: #{tpu_custom_call.1} parent=35 // pred_check_branch
          %1057 = sbr.rel (%p1055) target = $region64
        $region63: #{tpu_custom_call.1} parent=35 // pred_region
          %s1058 = smul.u32 2, %s26
          %s1060 = ssub.s32 128, 128
          %1061 = vsyncadd %s1051, %s1060
          %s1062 = smul.addr %s25, 2
          %s1063 = sadd.s32 %s1058, %s1062
          %s1064 = smul.addr %s1063, 64
          %s1065 = scalar_lea.hbm %s5, %s1064
          %s1066 = sshll.u32 %s1054, 4
          %s1067 = int_to_ptr.vmem [resolvable:$true] %s1066
          %1072 = dma.vmem_to_hbm [thread:$0]  %s1067, 128, %s1065, %s1051, 64, 64, 4
        $region64: #{tpu_custom_call.1} parent=35 // pred_fallthru
          _
      $region36: #{tpu_custom_call.1} parent=5 // pred_fallthru
        _
      %p1073 = scmp.le.s32.totalorder 2, %s16
      // Predicated region
      $region65: #{tpu_custom_call.1} parent=5 // pred_check
        %p1074 = pneg %p1073
      $region66: #{tpu_custom_call.1} parent=5 // pred_check_branch
        %1076 = sbr.rel (%p1074) target = $region68
      $region67: #{tpu_custom_call.1} parent=5 // pred_region
        %s1077 = ssub.s32 %s16, 2
        // Predicated region
        $region69: #{tpu_custom_call.1} parent=67 // pred_check
          %p1078 = pneg %p143
        $region70: #{tpu_custom_call.1} parent=67 // pred_check_branch
          %1080 = sbr.rel (%p1078) target = $region72
        $region71: #{tpu_custom_call.1} parent=67 // pred_region
          %s1081 = sand.u32 %s128, 1
          %s1082 = scalar_lea.sflag [#allocation6], %s1081
          %s1083 = sand.u32 %s128, 1
          %s1084 = smul.addr %s1083, 8
          %s1085 = scalar_lea.vmem [#allocation9], %s1084
          %1086 = dma.done %s1082, 128
        $region72: #{tpu_custom_call.1} parent=67 // pred_fallthru
          _
      $region68: #{tpu_custom_call.1} parent=5 // pred_fallthru
        _
    $region6: #{tpu_custom_call.1} parent=1 // loop_footer
      %s20 = sadd.s32 1, %s16
    $region7: #{tpu_custom_call.1} parent=1 // loop_footer_branch
      %15 = sbr.rel target = $region3
    $region8: #{tpu_custom_call.1} parent=1 // loop_exit
      _
    %1087 = vsyncpa [#allocation5], 1
    %s1088 = scalar_lea.sflag [#allocation5], 1
    %1089 = vsyncpa %s1088, 1
    %1090 = vsyncpa [#allocation8], 1
    %1091 = vsyncpa [#allocation6], 1
    %s1092 = scalar_lea.sflag [#allocation6], 1
    %1093 = vsyncpa %s1092, 1
  %1094 = vsyncmov [#allocation3]
  %s1095 = vpop.sfrf %1094
  %p1096 = scmp.eq.s32.totalorder %s1095, 0
  %p1097 = pneg %p1096
  %1099 = shalt.err (%p1097)
  %s1100 = scalar_lea.sflag [#allocation3], 1
  %1101 = vsyncmov %s1100
  %s1102 = vpop.sfrf %1101
  %p1103 = scmp.eq.s32.totalorder %s1102, 0
  %p1104 = pneg %p1103
  %1106 = shalt.err (%p1104)

</llo_original>
